<compile_context>
chip_gen: v7x
topology: tpu7x:2x2x1
jax: 0.10.0
libtpu: 0.0.40
codegen_flags: <defaults>
</compile_context>

<pallas_src>
import functools

import jax
import jax.numpy as jnp
from jax import lax
from jax.experimental import pallas as pl
from jax.experimental.pallas import tpu as pltpu


# ------------------------------------------------------------------------- kernels


def _pos_emb_affine_kernel(tab_ref, out_ref, *, fold):
    """Positions generated in-kernel; single fused sin over the whole tile.

    tab_ref: (5, W) f32 resident constant table
       row 0: freq      = tile([inv_freq, inv_freq], fold)
       row 1: phase_off = tile([0]*half + [pi/2]*half, fold)   (cos(x) == sin(x+pi/2))
       row 2: lane_pos  = repeat(arange(fold), demb)           (per-lane folded seq offset)
       row 3: start     (broadcast)
       row 4: step      (broadcast)
    out_ref: (rows, W) block of the folded (ceil(seq/fold), fold*demb) output.
    """
    rows = out_ref.shape[0]
    base = lax.convert_element_type(pl.program_id(0) * rows, jnp.float32)
    row = lax.broadcasted_iota(jnp.int32, (rows, 1), 0).astype(jnp.float32) + base
    freq = tab_ref[0:1, :]
    off = tab_ref[1:2, :]
    lane_pos = tab_ref[2:3, :]
    start = tab_ref[3:4, :]
    step = tab_ref[4:5, :]
    seq_idx = row * float(fold) + lane_pos               # (rows, W) absolute position index
    phase = (start + step * seq_idx) * freq + off
    out_ref[...] = jnp.sin(phase).astype(out_ref.dtype)  # one full-width store


def _pos_emb_kernel(pos_ref, tab_ref, out_ref):
    """General path: arbitrary pos_seq DMA'd as a (rows, 1) column tile."""
    # TODO(synk): arbitrary pos_seq has no iota equivalent, so this path keeps the
    # lane-sparse (rows, 1) pos DMA; use the affine path for arange positions.
    phase = pos_ref[...] * tab_ref[0:1, :] + tab_ref[1:2, :]
    out_ref[...] = jnp.sin(phase).astype(out_ref.dtype)


# ------------------------------------------------------------------------- helpers


def _pick_row_tile(total_rows, width, itemsize, target_bytes=3 << 20):
    """Rows per output tile: ~2-4 MiB tiles (HBM-roofline knee), sublane aligned, and
    >=2 grid steps when there is enough work (engages both TensorCores on v7x)."""
    mult = 16 if itemsize < 4 else 8          # bf16 packs 16 sublanes per vreg
    cap = (target_bytes // max(width * itemsize, 1)) // mult * mult
    cap = int(min(max(cap, mult), 4096))
    if total_rows > cap:
        return cap
    if total_rows >= 4 * mult:                # enough work -> split for megacore
        half = ((total_rows + 1) // 2 + mult - 1) // mult * mult
        if half < total_rows:
            return half
    return int(total_rows)


def _freq_off_rows(inv_freq):
    """Full-width frequency row and the +pi/2 phase-offset row for the cos half."""
    inv = inv_freq.astype(jnp.float32).reshape(-1)
    half = inv.shape[0]
    freq = jnp.concatenate([inv, inv])
    off = jnp.concatenate([jnp.zeros((half,), jnp.float32),
                           jnp.full((half,), jnp.float32(0.5 * jnp.pi))])
    return freq, off


# ------------------------------------------------------------------------- wrappers


def positional_embedding_affine(seq_len, inv_freq, bsz=None, *, start, step=-1.0,
                                out_dtype=jnp.float32):
    """Fast path for pos_seq[i] = start + step*i (Transformer-XL: start=klen-1, step=-1)."""
    seq_len = int(seq_len)
    freq, off = _freq_off_rows(inv_freq)
    demb = freq.shape[0]

    # Lane-dense fold for narrow embeddings: pack `fold` consecutive positions per
    # 128-lane row so every store is an unmasked full-width vst.
    fold = 128 // demb if (demb < 128 and 128 % demb == 0) else 1
    width = fold * demb
    rows_total = -(-seq_len // fold)
    pad_seq = rows_total * fold

    lane_pos = jnp.repeat(jnp.arange(fold, dtype=jnp.float32), demb,
                          total_repeat_length=width)
    table = jnp.stack([
        jnp.tile(freq, fold),
        jnp.tile(off, fold),
        lane_pos,
        jnp.broadcast_to(jnp.asarray(start, jnp.float32), (width,)),
        jnp.broadcast_to(jnp.asarray(step, jnp.float32), (width,)),
    ], axis=0)                                                      # (5, width)

    rows_blk = _pick_row_tile(rows_total, width, jnp.dtype(out_dtype).itemsize)
    grid = (pl.cdiv(rows_total, rows_blk),)

    out2d = pl.pallas_call(
        functools.partial(_pos_emb_affine_kernel, fold=fold),
        out_shape=jax.ShapeDtypeStruct((rows_total, width), out_dtype),
        grid_spec=pltpu.PrefetchScalarGridSpec(
            num_scalar_prefetch=0,
            grid=grid,
            in_specs=[pl.BlockSpec((5, width), lambda i: (0, 0))],   # resident table
            out_specs=pl.BlockSpec((rows_blk, width), lambda i: (i, 0)),
        ),
        compiler_params=pltpu.CompilerParams(
            dimension_semantics=("parallel",),                       # shard tiles across TCs
        ),
    )(table)

    pos_emb = out2d.reshape(pad_seq, demb)        # free: contiguous row-major un-fold
    if pad_seq != seq_len:
        pos_emb = pos_emb[:seq_len]
    pos_emb = pos_emb[:, None, :]                 # (seq, 1, demb)
    if bsz is not None:
        pos_emb = jnp.broadcast_to(pos_emb, (seq_len, bsz, demb))
    return pos_emb


def positional_embedding(pos_seq, inv_freq, bsz=None, *, out_dtype=jnp.float32):
    """General path: arbitrary pos_seq, semantics identical to the torch forward."""
    seq = pos_seq.shape[0]
    freq, off = _freq_off_rows(inv_freq)
    demb = freq.shape[0]

    pos2d = pos_seq.astype(jnp.float32).reshape(seq, 1)
    table = jnp.stack([freq, off], axis=0)                           # (2, demb)

    rows_blk = _pick_row_tile(seq, demb, jnp.dtype(out_dtype).itemsize)
    grid = (pl.cdiv(seq, rows_blk),)

    out2d = pl.pallas_call(
        _pos_emb_kernel,
        out_shape=jax.ShapeDtypeStruct((seq, demb), out_dtype),
        grid_spec=pltpu.PrefetchScalarGridSpec(
            num_scalar_prefetch=0,
            grid=grid,
            in_specs=[
                pl.BlockSpec((rows_blk, 1), lambda i: (i, 0)),       # pos column tile
                pl.BlockSpec((2, demb), lambda i: (0, 0)),           # resident table
            ],
            out_specs=pl.BlockSpec((rows_blk, demb), lambda i: (i, 0)),
        ),
        compiler_params=pltpu.CompilerParams(
            dimension_semantics=("parallel",),
        ),
    )(pos2d, table)

    pos_emb = out2d[:, None, :]
    if bsz is not None:
        pos_emb = jnp.broadcast_to(pos_emb, (seq, bsz, demb))
    return pos_emb


class PositionalEmbedding:
    """JAX/Pallas port of the torch module; __call__ == forward(pos_seq, bsz)."""

    def __init__(self, demb, out_dtype=jnp.float32):
        self.demb = demb
        self.inv_freq = 1.0 / (10000.0 ** (jnp.arange(0.0, demb, 2.0,
                                                      dtype=jnp.float32) / demb))
        self.out_dtype = out_dtype

    def __call__(self, pos_seq, bsz=None):
        return positional_embedding(pos_seq, self.inv_freq, bsz,
                                    out_dtype=self.out_dtype)

    def arange(self, seq_len, bsz=None, *, start=None, step=-1.0):
        """Fast path for the usual pos_seq = arange(seq_len-1, -1, -1) call."""
        if start is None:
            start = float(seq_len - 1)
        return positional_embedding_affine(seq_len, self.inv_freq, bsz,
                                           start=start, step=step,
                                           out_dtype=self.out_dtype)


# ------------------------------------------------------------------------- reference


def _reference(pos_seq, inv_freq, bsz=None):
    sin_inp = jnp.outer(pos_seq.astype(jnp.float32), inv_freq.astype(jnp.float32))
    emb = jnp.concatenate([jnp.sin(sin_inp), jnp.cos(sin_inp)], axis=-1)[:, None, :]
    if bsz is not None:
        emb = jnp.broadcast_to(emb, (emb.shape[0], bsz, emb.shape[-1]))
    return emb


if __name__ == "__main__":
    key = jax.random.PRNGKey(0)

    # --- 1) module-sized case: demb=32, seq=8, bsz=2, the usual arange positions -----
    demb, seq, bsz = 32, 8, 2
    mod = PositionalEmbedding(demb)
    pos_seq = jnp.arange(seq - 1, -1, -1, dtype=jnp.float32)

    out_aff = jax.block_until_ready(mod.arange(seq, bsz))   # iota fast path (lane-dense fold)
    out_gen = jax.block_until_ready(mod(pos_seq, bsz))      # general path (torch forward())
    ref = _reference(pos_seq, mod.inv_freq, bsz)
    assert out_aff.shape == (seq, bsz, demb) and out_gen.shape == (seq, bsz, demb)
    # cos fused as sin(x + pi/2) differs from cos(x) by O(ulp(x)); |x| <= 7 here.
    assert jnp.allclose(out_aff, ref, atol=2e-5), "affine path mismatch (small)"
    assert jnp.allclose(out_gen, ref, atol=2e-5), "general path mismatch (small)"

    # --- 2) fold padding: seq not a multiple of 128 // demb ---------------------------
    seq_b = 10
    pos_b = jnp.arange(seq_b - 1, -1, -1, dtype=jnp.float32)
    out_b = jax.block_until_ready(
        positional_embedding_affine(seq_b, mod.inv_freq, None, start=seq_b - 1.0, step=-1.0))
    assert out_b.shape == (seq_b, 1, demb)
    assert jnp.allclose(out_b, _reference(pos_b, mod.inv_freq, None), atol=2e-5), \
        "affine path mismatch (padded fold)"

    # --- 3) arbitrary (non-arange) positions through the general path -----------------
    pos_rand = jax.random.uniform(key, shape=(64,), dtype=jnp.float32,
                                  minval=-20.0, maxval=20.0)
    out_r = jax.block_until_ready(positional_embedding(pos_rand, mod.inv_freq, None))
    assert jnp.allclose(out_r, _reference(pos_rand, mod.inv_freq, None), atol=5e-5), \
        "general path mismatch (random positions)"

    # --- 4) larger tiled case (2 grid steps, demb >= 128 so no fold) ------------------
    demb2, seq2 = 256, 640
    mod2 = PositionalEmbedding(demb2)
    pos2 = jnp.arange(seq2 - 1, -1, -1, dtype=jnp.float32)
    ref2 = _reference(pos2, mod2.inv_freq, None)
    out2a = jax.block_until_ready(mod2.arange(seq2))
    out2g = jax.block_until_ready(mod2(pos2))
    assert out2a.shape == (seq2, 1, demb2)
    # larger |x| -> larger O(ulp(x)) deviation of sin(x+pi/2) vs the separate-cos reference.
    assert jnp.allclose(out2a, ref2, atol=5e-4), "affine path mismatch (large)"
    assert jnp.allclose(out2g, ref2, atol=5e-4), "general path mismatch (large)"

    print("KERNEL_OK")
</pallas_src>

<mosaic_0001>
module attributes {stable_mosaic.version = 11 : i64} {
  func.func @_pos_emb_affine_kernel(%arg0: i32, %arg1: memref<5x128xf32, #tpu.memory_space<vmem>>, %arg2: memref<2x128xf32, #tpu.memory_space<vmem>>) attributes {dimension_semantics = [#tpu.dimension_semantics<parallel>], iteration_bounds = array<i64: 1>, scalar_prefetch = 0 : i64, scratch_operands = 0 : i64, tpu.core_type = #tpu.core_type<tc>, window_params = [{pipeline_mode = #tpu.pipeline_mode<synchronous>, transform_indices = @transform_0, window_bounds = array<i64: 5, 128>}, {transform_indices = @transform_1, window_bounds = array<i64: 2, 128>}]} {
    %c2_i32 = arith.constant 2 : i32
    %0 = arith.muli %arg0, %c2_i32 : i32
    %1 = arith.sitofp %0 : i32 to f32
    %2 = tpu.iota {dimensions = array<i32: 0>} : vector<2x1xi32>
    %3 = arith.sitofp %2 : vector<2x1xi32> to vector<2x1xf32>
    %4 = vector.broadcast %1 : f32 to vector<2x1xf32>
    %5 = arith.addf %3, %4 : vector<2x1xf32>
    %c0 = arith.constant 0 : index
    %c0_0 = arith.constant 0 : index
    %6 = vector.load %arg1[%c0, %c0_0] : memref<5x128xf32, #tpu.memory_space<vmem>>, vector<1x128xf32>
    %c1 = arith.constant 1 : index
    %c0_1 = arith.constant 0 : index
    %7 = vector.load %arg1[%c1, %c0_1] : memref<5x128xf32, #tpu.memory_space<vmem>>, vector<1x128xf32>
    %c2 = arith.constant 2 : index
    %c0_2 = arith.constant 0 : index
    %8 = vector.load %arg1[%c2, %c0_2] : memref<5x128xf32, #tpu.memory_space<vmem>>, vector<1x128xf32>
    %c3 = arith.constant 3 : index
    %c0_3 = arith.constant 0 : index
    %9 = vector.load %arg1[%c3, %c0_3] : memref<5x128xf32, #tpu.memory_space<vmem>>, vector<1x128xf32>
    %c4 = arith.constant 4 : index
    %c0_4 = arith.constant 0 : index
    %10 = vector.load %arg1[%c4, %c0_4] : memref<5x128xf32, #tpu.memory_space<vmem>>, vector<1x128xf32>
    %cst = arith.constant 4.000000e+00 : f32
    %11 = vector.broadcast %cst : f32 to vector<2x1xf32>
    %12 = arith.mulf %5, %11 : vector<2x1xf32>
    %13 = vector.broadcast %12 : vector<2x1xf32> to vector<2x128xf32>
    %14 = vector.broadcast %8 : vector<1x128xf32> to vector<2x128xf32>
    %15 = arith.addf %13, %14 : vector<2x128xf32>
    %16 = vector.broadcast %10 : vector<1x128xf32> to vector<2x128xf32>
    %17 = arith.mulf %16, %15 : vector<2x128xf32>
    %18 = vector.broadcast %9 : vector<1x128xf32> to vector<2x128xf32>
    %19 = arith.addf %18, %17 : vector<2x128xf32>
    %20 = vector.broadcast %6 : vector<1x128xf32> to vector<2x128xf32>
    %21 = arith.mulf %19, %20 : vector<2x128xf32>
    %22 = vector.broadcast %7 : vector<1x128xf32> to vector<2x128xf32>
    %23 = arith.addf %21, %22 : vector<2x128xf32>
    %24 = math.sin %23 : vector<2x128xf32>
    %c0_5 = arith.constant 0 : index
    %c0_6 = arith.constant 0 : index
    %25 = vector.load %arg2[%c0_5, %c0_6] : memref<2x128xf32, #tpu.memory_space<vmem>>, vector<2x128xf32>
    tpu.vector_store %arg2[%c0_5, %c0_6], %24 {strides = array<i32>} : memref<2x128xf32, #tpu.memory_space<vmem>>, vector<2x128xf32>,
    return
  }
  func.func @transform_0(%arg0: i32) -> (i32, i32) {
    %c0_i32 = arith.constant 0 : i32
    %c0_i32_0 = arith.constant 0 : i32
    %c0_i32_1 = arith.constant 0 : i32
    return %c0_i32, %c0_i32_0 : i32, i32
  }
  func.func @transform_1(%arg0: i32) -> (i32, i32) {
    %c0_i32 = arith.constant 0 : i32
    %c0_i32_0 = arith.constant 0 : i32
    return %arg0, %c0_i32 : i32, i32
  }
}

</mosaic_0001>

<llo_original>
// kernel: tpu_custom_call.1
$region0: #{tpu_custom_call.1}
  #allocation0 [shape = 'u32[]', space=smem, size = 0x4, offset = 0x4, fixed_abs, tag = 'smem constant byte address 0x4 - core index']
  #allocation1 [shape = 'u32[144,128]{1,0:T(1,128)}', space=vmem, size = 0x12000, scoped, tag = 'internal scratch']
  %s0 = inlined_call_operand.hbm [shape: f32[5,128], index: 0, kind: input, shape index: {}]
  %s1 = inlined_call_operand.hbm [shape: f32[2,128], index: 1, kind: output, shape index: {}]
  %s2 = sld [smem:[#allocation0]]
  $region18: #{tpu_custom_call.1} parent=0
    _
  %s4 = ssub.s32 1, %s2
  %s5 = scalar_select 0, %s4, %s2
  $region1: #{tpu_custom_call.1} parent=0
    #allocation2 [shape = 'u8[4096]{0}', space=vmem, size = 0x1000, scoped, tag = 'input window, operand 0, single buffered']
    #allocation3 [shape = 's32[1]{0}', space=sflag, size = 0x4, scoped, tag = 'scoped memory for tpu_custom_call.1']
    #allocation4 [shape = 's32[1]{0}', space=sflag, size = 0x4, scoped, tag = 'scoped memory for tpu_custom_call.1']
    #allocation5 [shape = 'u8[1024]{0}', space=vmem, size = 0x400, scoped, tag = 'output window, operand 0, single buffered']
    %6 = vsyncpa [#allocation3], 0
    %7 = vsyncpa [#allocation4], 0
    // Predicated region
    $region2: #{tpu_custom_call.1} parent=1 // pred_check
      _
    $region3: #{tpu_custom_call.1} parent=1 // pred_check_branch
      %9 = sbr.rel (0) target = $region5
    $region4: #{tpu_custom_call.1} parent=1 // pred_region
      %s11 = ssub.s32 128, 128
      %12 = vsyncadd [#allocation3], %s11
      %s14 = sshll.u32 [#allocation2], 4
      %s15 = int_to_ptr.vmem [resolvable:$true] %s14
      %17 = dma.hbm_to_vmem [thread:$0]  %s0, 128, %s15, [#allocation3]
    $region5: #{tpu_custom_call.1} parent=1 // pred_fallthru
      _
    // Predicated region
    $region6: #{tpu_custom_call.1} parent=1 // pred_check
      _
    $region7: #{tpu_custom_call.1} parent=1 // pred_check_branch
      %19 = sbr.rel (0) target = $region9
    $region8: #{tpu_custom_call.1} parent=1 // pred_region
      %20 = dma.done [#allocation3], 128
    $region9: #{tpu_custom_call.1} parent=1 // pred_fallthru
      _
    %s21 = smul.u32 0, 2
    %s22 = scvt.s32.f32 %s21
    %v23 = vlaneseq
    %v24 = vshrl.u32 %v23, 7
    %v25 = vcvt.s32.f32 %v24
    %v26 = vstv %s22
    %v27 = vadd.f32 %v25, %v26
    %v28 = vld [vmem:[#allocation2] sm:$0x1]
    %v29 = vld [vmem:[#allocation2 + $0x1] sm:$0x1]
    %v30 = vld [vmem:[#allocation2 + $0x2] sm:$0x1]
    %v31 = vld [vmem:[#allocation2 + $0x3] sm:$0x1]
    %v32 = vld [vmem:[#allocation2 + $0x4] sm:$0x1]
    %v33 = vmul.f32 %v27, 4.0
    %v34 = vlaneseq
    %v35 = vshrl.u32 %v34, 7
    %v36 = vsub.s32 0, %v35
    %v37 = vrot.slane %v30, %v36
    %v38 = vadd.f32 %v33, %v37
    %v39 = vlaneseq
    %v40 = vshrl.u32 %v39, 7
    %v41 = vsub.s32 0, %v40
    %v42 = vrot.slane %v32, %v41
    %v43 = vmul.f32 %v42, %v38
    %v44 = vlaneseq
    %v45 = vshrl.u32 %v44, 7
    %v46 = vsub.s32 0, %v45
    %v47 = vrot.slane %v31, %v46
    %v48 = vadd.f32 %v47, %v43
    %v49 = vlaneseq
    %v50 = vshrl.u32 %v49, 7
    %v51 = vsub.s32 0, %v50
    %v52 = vrot.slane %v28, %v51
    %v53 = vmul.f32 %v48, %v52
    %v54 = vlaneseq
    %v55 = vshrl.u32 %v54, 7
    %v56 = vsub.s32 0, %v55
    %v57 = vrot.slane %v29, %v56
    %v58 = vadd.f32 %v53, %v57
    %v59 = vand.u32 2147483647, %v58
    %vm60 = vcmp.le.f32.partialorder %v59, 0.7853982
    %vm61 = vcmp.lt.s32.totalorder %v58, 0
    %v62 = vand.u32 %v58, 2139095040
    %v63 = vshrl.u32 %v62, 23
    %v64 = vsub.s32 %v63, 127
    %v65 = vand.u32 2147483647, %v58
    %v66 = vand.u32 %v65, 8388607
    %v67 = vor.u32 %v66, 8388608
    %v68 = vsub.s32 0, %v67
    %v69 = vadd.s32 %v64, 1
    %vm70 = vcmp.gt.s32.totalorder %v69, 0
    %v71 = vsel %vm70, %v69, 0
    %v72 = vshrl.u32 %v71, 5
    %v73 = vand.u32 %v71, 31
    %v74 = vsub.s32 32, %v73
    %v75 = vshrl.u32 683565275, %v74
    %v76 = vshll.u32 683565275, %v73
    %v77 = vshrl.u32 2475754826, %v74
    %v78 = vor.u32 %v76, %v77
    %v79 = vshll.u32 2475754826, %v73
    %v80 = vshrl.u32 2131351028, %v74
    %v81 = vor.u32 %v79, %v80
    %v82 = vshll.u32 2131351028, %v73
    %v83 = vshrl.u32 2102212464, %v74
    %v84 = vor.u32 %v82, %v83
    %v85 = vshll.u32 2102212464, %v73
    %v86 = vshrl.u32 920167782, %v74
    %v87 = vor.u32 %v85, %v86
    %v88 = vshll.u32 920167782, %v73
    %v89 = vshrl.u32 1326507024, %v74
    %v90 = vor.u32 %v88, %v89
    %vm91 = vcmp.lt.s32.totalorder %v72, 1
    %vm92 = vcmp.lt.s32.totalorder %v72, 2
    %vm93 = vcmp.lt.s32.totalorder %v72, 3
    %vm94 = vcmp.lt.s32.totalorder %v72, 4
    %v95 = vsel %vm91, %v75, %v78
    %v96 = vsel %vm94, %v84, 2102212464
    %v97 = vsel %vm93, %v81, %v96
    %v98 = vsel %vm92, %v95, %v97
    %v99 = vsel %vm91, %v78, %v81
    %v100 = vsel %vm94, %v87, 920167782
    %v101 = vsel %vm93, %v84, %v100
    %v102 = vsel %vm92, %v99, %v101
    %v103 = vsel %vm91, %v81, %v84
    %v104 = vsel %vm94, %v90, 1326507024
    %v105 = vsel %vm93, %v87, %v104
    %v106 = vsel %vm92, %v103, %v105
    %v107 = vshll.u32 %v67, 8
    %v108 = vmul.u32.u64.compose %v107, %v106
    %v109 = vextract.low.u32 %v108
    %v110 = vextract.high.u32 %v108
    %v111 = vmul.u32.u64.compose %v107, %v102
    %v112 = vextract.low.u32 %v111
    %v113 = vextract.high.u32 %v111
    %v114 = vmul.u32 %v107, %v98
    %v115 = vadd.s32 %v110, %v112
    %vm116 = vc.u32 %v110, %v112
    %v117 = vadd.s32 %v113, 1
    %v118 = vsel %vm116, %v117, %v113
    %v119 = vadd.s32 %v114, %v118
    %v120 = vadd.s32 %v119, 536870912
    %v121 = vshrl.u32 %v120, 30
    %v122 = vshll.u32 %v121, 30
    %v123 = vsub.s32 %v119, %v122
    %vm124 = vcmp.lt.s32.totalorder %v123, 0
    %v125 = vsub.s32 0, %v123
    %v126 = vsel %vm124, %v125, %v123
    %v127 = vclz %v126
    %v128 = vsub.s32 %v127, 2
    %vm129 = vcmp.gt.s32.totalorder 0, %v128
    %v130 = vsel %vm129, 0, %v128
    %v131 = vsub.s32 32, %v130
    %v132 = vshll.u32 %v123, %v130
    %v133 = vshrl.u32 %v115, %v131
    %v134 = vor.u32 %v132, %v133
    %v135 = vsub.s32 4294967266, %v130
    %v136 = vadd.s32 %v135, 127
    %v137 = vshll.u32 %v136, 23
    %v138 = vor.u32 4788187, %v137
    %v139 = vand.u32 2147483647, %v138
    %v141 = vcvt.s32.f32 %v134
    %v142 = vmul.f32 %v141, %v139
    %v143 = vxor.u32 %v142, 2147483648
    %v144 = vsel %vm61, %v143, %v142
    %v145 = vsub.s32 4, %v121
    %v146 = vsel %vm61, %v145, %v121
    %v147 = vsel %vm60, %v58, %v144
    %v148 = vsel %vm60, 0, %v146
    %v149 = vcosq.f32.pop %v147
    %v150 = vsinq.f32.pop %v147
    %vm151 = vweird.f32 %v58
    %v152 = vadd.s32 %v148, 3
    %v153 = vand.u32 %v152, 3
    %vm154 = vcmp.lt.s32.totalorder %v153, 2
    %vm155 = vcmp.eq.s32.totalorder %v153, 0
    %v156 = vxor.u32 %v150, 2147483648
    %v157 = vsel %vm155, %v149, %v156
    %vm158 = vcmp.eq.s32.totalorder %v153, 2
    %v159 = vxor.u32 %v149, 2147483648
    %v160 = vsel %vm158, %v159, %v150
    %v161 = vsel %vm154, %v157, %v160
    %v162 = vsel %vm151, nan, %v161
    %163 = vst [vmem:[#allocation5] sm:$0x3] %v162
    // Predicated region
    $region10: #{tpu_custom_call.1} parent=1 // pred_check
      _
    $region11: #{tpu_custom_call.1} parent=1 // pred_check_branch
      %165 = sbr.rel (0) target = $region13
    $region12: #{tpu_custom_call.1} parent=1 // pred_region
      %s167 = ssub.s32 32, 32
      %168 = vsyncadd [#allocation4], %s167
      %s170 = sshll.u32 [#allocation5], 4
      %s171 = int_to_ptr.vmem [resolvable:$true] %s170
      %173 = dma.vmem_to_hbm [thread:$0]  %s171, 32, %s1, [#allocation4]
    $region13: #{tpu_custom_call.1} parent=1 // pred_fallthru
      _
    // Predicated region
    $region14: #{tpu_custom_call.1} parent=1 // pred_check
      _
    $region15: #{tpu_custom_call.1} parent=1 // pred_check_branch
      %175 = sbr.rel (0) target = $region17
    $region16: #{tpu_custom_call.1} parent=1 // pred_region
      %176 = dma.done [#allocation4], 32
    $region17: #{tpu_custom_call.1} parent=1 // pred_fallthru
      _
    %177 = vsyncpa [#allocation3], 1
    %178 = vsyncpa [#allocation4], 1

</llo_original>
